<compile_context>
chip_gen: v6e
topology: v6e:2x2x1
jax: 0.10.0
libtpu: 0.0.40
codegen_flags: <defaults>
</compile_context>

<pallas_src>
import functools

import jax
import jax.numpy as jnp
from jax.experimental import pallas as pl
from jax.experimental.pallas import tpu as pltpu


# ----------------------------------------------------------------------------
# Kernel: whole sequence in one body, hidden state as a fori_loop carry
# ----------------------------------------------------------------------------
def question_rnn_kernel(n_layers, T, H,
                        tok_ref,      # SMEM (T,) int32   scalar-prefetched tokens
                        gtab_ref,     # VMEM (V, 1, 3H)   pre-projected embedding table
                        h0_ref,       # VMEM (1, H)       initial hidden
                        w_i_ref,      # VMEM (H, 3H)      W_ih.T  (used only for layers >= 2)
                        w_h_ref,      # VMEM (H, 3H)      W_hh.T, gate order [r|z|n]
                        b_ref,        # VMEM (1, 4H)      [b_ir+b_hr | b_iz+b_hz | b_in | b_hn]
                        out_ref):     # VMEM (T, 1, H)    per-step output (resident)
    H2, H3 = 2 * H, 3 * H

    # Hoisted constants: read/slice once, stay in vregs across the whole sequence.
    w_h = w_h_ref[...]
    b = b_ref[...]
    b_hn = b[:, H3:H3 + H]            # hidden-side bias of the n gate
    w_i = w_i_ref[...]                # only used when n_layers > 1 (DCE'd otherwise)
    b_i3 = b[:, 0:H3]                 # [b_r | b_z | b_in], r/z hidden biases folded in

    def gru_cell(gi, h):
        # gi already contains the input projection + all purely-additive biases.
        gh = jnp.dot(h, w_h, preferred_element_type=jnp.float32)     # (1, 3H)
        rz = jax.nn.sigmoid(gi[:, 0:H2] + gh[:, 0:H2])               # fused r,z gates
        r = rz[:, 0:H]
        z = rz[:, H:H2]
        n = jnp.tanh(gi[:, H2:H3] + r * (gh[:, H2:H3] + b_hn))
        return (1.0 - z) * n + z * h

    def step(t, h):
        tok = tok_ref[t]                          # scalar from SMEM
        gi = gtab_ref[tok]                        # (1, 3H): lookup == layer-0 input proj
        h = gru_cell(gi, h)
        # Inner layers (n_layers > 1): input projection depends on the same-step
        # hidden, so it must stay inside the recurrence.
        for _ in range(n_layers - 1):
            gi2 = jnp.dot(h, w_i, preferred_element_type=jnp.float32) + b_i3
            h = gru_cell(gi2, h)
        out_ref[t] = h                            # resident (T,1,H) block, written in VMEM
        return h

    jax.lax.fori_loop(0, T, step, h0_ref[...])


# ----------------------------------------------------------------------------
# One-time parameter preparation (out of the per-call path)
# ----------------------------------------------------------------------------
def prepare_params(params):
    """Pre-transpose weights, fold biases, and pre-project the embedding table."""
    emb = jnp.asarray(params["embedding"], jnp.float32)       # (V, H)
    V, H = emb.shape
    W_ih = jnp.asarray(params["weight_ih"], jnp.float32)      # (3H, H), rows [r;z;n]
    W_hh = jnp.asarray(params["weight_hh"], jnp.float32)      # (3H, H)
    b_ih = jnp.asarray(params["bias_ih"], jnp.float32)        # (3H,)
    b_hh = jnp.asarray(params["bias_hh"], jnp.float32)        # (3H,)

    w_i = W_ih.T                                               # (H, 3H), cols [r|z|n]
    w_h = W_hh.T                                               # (H, 3H)
    b_i3 = jnp.concatenate([
        b_ih[0:H] + b_hh[0:H],                                 # b_r (folded: purely additive)
        b_ih[H:2 * H] + b_hh[H:2 * H],                         # b_z (folded)
        b_ih[2 * H:3 * H],                                     # b_in
    ]).reshape(1, 3 * H)
    b = jnp.concatenate([b_i3.reshape(-1),
                         b_hh[2 * H:3 * H]]).reshape(1, 4 * H)  # + b_hn

    # Layer-0 input projection folded into the table: gtab[v] = emb[v] @ W_ih^T + b_i3.
    # (3x table memory; for huge vocabularies keep the raw table and do an in-kernel
    #  batched (T,H)@(H,3H) projection instead.)
    gtab = (jnp.dot(emb, w_i) + b_i3).reshape(V, 1, 3 * H)

    return {"gtab": gtab, "w_i": w_i, "w_h": w_h, "b": b,
            "hidden_size": H, "vocab": V}


# ----------------------------------------------------------------------------
# Wrappers
# ----------------------------------------------------------------------------
def _run_question_rnn(tokens, h0, prepped, n_layers):
    """tokens: (T,) int32; h0: (1, H) f32.  Returns per-step outputs (T, 1, H)."""
    H = prepped["hidden_size"]
    V = prepped["vocab"]
    T = int(tokens.shape[0])
    # NOTE: PyTorch's nn.Embedding errors on out-of-range indices; we clip instead.
    tokens = jnp.clip(tokens.astype(jnp.int32), 0, V - 1)

    return pl.pallas_call(
        functools.partial(question_rnn_kernel, n_layers, T, H),
        out_shape=jax.ShapeDtypeStruct((T, 1, H), jnp.float32),
        grid_spec=pltpu.PrefetchScalarGridSpec(
            num_scalar_prefetch=1,
            grid=(1,),                                   # single step: loop is internal
            in_specs=[
                # All operands resident for the whole sequence (constant index_map).
                pl.BlockSpec((V, 1, 3 * H), lambda i, tok: (0, 0, 0)),  # gtab
                pl.BlockSpec((1, H), lambda i, tok: (0, 0)),            # h0
                pl.BlockSpec((H, 3 * H), lambda i, tok: (0, 0)),        # W_ih.T
                pl.BlockSpec((H, 3 * H), lambda i, tok: (0, 0)),        # W_hh.T
                pl.BlockSpec((1, 4 * H), lambda i, tok: (0, 0)),        # biases
            ],
            out_specs=pl.BlockSpec((T, 1, H), lambda i, tok: (0, 0, 0)),
        ),
        compiler_params=pltpu.CompilerParams(
            dimension_semantics=("arbitrary",)),
    )(tokens, prepped["gtab"], h0, prepped["w_i"], prepped["w_h"], prepped["b"])


def question_rnn_forward(token, hidden, prepped, n_layers=1):
    """Single-token module forward.  token: int scalar; hidden: (1,1,H).
    Returns (output, hidden), each (1,1,H) (identical for this module)."""
    H = prepped["hidden_size"]
    tok = jnp.asarray(token, jnp.int32).reshape(1)
    h0 = hidden.reshape(1, H).astype(jnp.float32)
    out = _run_question_rnn(tok, h0, prepped, n_layers)       # (1, 1, H)
    out = out.reshape(1, 1, H)
    return out, out


def question_rnn_forward_sequence(tokens, hidden, prepped, n_layers=1):
    """Process a whole token sequence in one pallas_call (== repeated forward calls).
    Returns (outputs (T,1,1,H), final hidden (1,1,H))."""
    H = prepped["hidden_size"]
    tokens = jnp.asarray(tokens, jnp.int32).reshape(-1)
    T = tokens.shape[0]
    h0 = hidden.reshape(1, H).astype(jnp.float32)
    out = _run_question_rnn(tokens, h0, prepped, n_layers)    # (T, 1, H)
    return out.reshape(T, 1, 1, H), out[T - 1].reshape(1, 1, H)


# ----------------------------------------------------------------------------
# Plain-JAX reference (torch.nn.GRU semantics)
# ----------------------------------------------------------------------------
def reference_forward_sequence(tokens, hidden, params, n_layers=1):
    emb = params["embedding"]
    H = emb.shape[1]
    W_ih, W_hh = params["weight_ih"], params["weight_hh"]
    b_ih, b_hh = params["bias_ih"], params["bias_hh"]
    h = hidden.reshape(1, H)
    outs = []
    for idx in range(tokens.shape[0]):
        x = emb[tokens[idx]].reshape(1, H)
        for _ in range(n_layers):
            gi = x @ W_ih.T + b_ih
            gh = h @ W_hh.T + b_hh
            i_r, i_z, i_n = gi[:, :H], gi[:, H:2 * H], gi[:, 2 * H:]
            h_r, h_z, h_n = gh[:, :H], gh[:, H:2 * H], gh[:, 2 * H:]
            r = jax.nn.sigmoid(i_r + h_r)
            z = jax.nn.sigmoid(i_z + h_z)
            n = jnp.tanh(i_n + r * h_n)
            h = (1.0 - z) * n + z * h
            x = h
        outs.append(x)
    return jnp.stack(outs).reshape(tokens.shape[0], 1, 1, H), h.reshape(1, 1, H)


def init_params(key, input_size, hidden_size):
    """Deterministic synthetic parameters with PyTorch-native shapes."""
    k_emb, k_wih, k_whh, k_bih, k_bhh = jax.random.split(key, 5)
    bound = 1.0 / jnp.sqrt(hidden_size)
    u = lambda k, shape: jax.random.uniform(k, shape, jnp.float32, -bound, bound)
    return {
        "embedding": jax.random.normal(k_emb, (input_size, hidden_size), jnp.float32),
        "weight_ih": u(k_wih, (3 * hidden_size, hidden_size)),
        "weight_hh": u(k_whh, (3 * hidden_size, hidden_size)),
        "bias_ih":   u(k_bih, (3 * hidden_size,)),
        "bias_hh":   u(k_bhh, (3 * hidden_size,)),
    }


if __name__ == "__main__":
    INPUT_SIZE = 50     # vocab size
    HIDDEN = 32
    SEQ_LEN = 8

    key = jax.random.PRNGKey(0)
    k_params, k_hidden, k_tok = jax.random.split(key, 3)
    params = init_params(k_params, INPUT_SIZE, HIDDEN)
    prepped = prepare_params(params)

    # initHidden() would be zeros; random hidden exercises the z*h path too.
    hidden = jax.random.normal(k_hidden, (1, 1, HIDDEN), jnp.float32)

    # --- single-token forward (exact module semantics, n_layers=1) ---
    token = jnp.int32(7)
    out, hid = question_rnn_forward(token, hidden, prepped, n_layers=1)
    out, hid = jax.block_until_ready(out), jax.block_until_ready(hid)
    ref_out, ref_hid = reference_forward_sequence(
        jnp.asarray([token], jnp.int32), hidden, params, n_layers=1)
    assert out.shape == (1, 1, HIDDEN) and hid.shape == (1, 1, HIDDEN)
    assert jnp.allclose(out, ref_out[0], atol=1e-5, rtol=1e-5)
    assert jnp.allclose(hid, ref_hid, atol=1e-5, rtol=1e-5)

    # --- sequence forward (== calling the module forward T times), n_layers=1 ---
    tokens = jax.random.randint(k_tok, (SEQ_LEN,), 0, INPUT_SIZE, jnp.int32)
    outs, hid_seq = question_rnn_forward_sequence(tokens, hidden, prepped, n_layers=1)
    outs, hid_seq = jax.block_until_ready(outs), jax.block_until_ready(hid_seq)
    ref_outs, ref_hid_seq = reference_forward_sequence(tokens, hidden, params, n_layers=1)
    assert outs.shape == (SEQ_LEN, 1, 1, HIDDEN) and hid_seq.shape == (1, 1, HIDDEN)
    assert jnp.allclose(outs, ref_outs, atol=1e-5, rtol=1e-5)
    assert jnp.allclose(hid_seq, ref_hid_seq, atol=1e-5, rtol=1e-5)

    # --- n_layers=2 exercises the per-step inner-layer input projection ---
    outs2, hid2 = question_rnn_forward_sequence(tokens, hidden, prepped, n_layers=2)
    outs2, hid2 = jax.block_until_ready(outs2), jax.block_until_ready(hid2)
    ref_outs2, ref_hid2 = reference_forward_sequence(tokens, hidden, params, n_layers=2)
    assert jnp.allclose(outs2, ref_outs2, atol=1e-5, rtol=1e-5)
    assert jnp.allclose(hid2, ref_hid2, atol=1e-5, rtol=1e-5)

    print("KERNEL_OK")
</pallas_src>

<mosaic_0001>
module attributes {stable_mosaic.version = 11 : i64} {
  func.func @question_rnn_kernel(%arg0: i32, %arg1: memref<1xi32, #tpu.memory_space<smem>>, %arg2: memref<50x1x96xf32, #tpu.memory_space<vmem>>, %arg3: memref<1x32xf32, #tpu.memory_space<vmem>>, %arg4: memref<32x96xf32, #tpu.memory_space<vmem>>, %arg5: memref<32x96xf32, #tpu.memory_space<vmem>>, %arg6: memref<1x128xf32, #tpu.memory_space<vmem>>, %arg7: memref<1x1x32xf32, #tpu.memory_space<vmem>>) attributes {dimension_semantics = [#tpu.dimension_semantics<arbitrary>], iteration_bounds = array<i64: 1>, scalar_prefetch = 1 : i64, scratch_operands = 0 : i64, tpu.core_type = #tpu.core_type<tc>, window_params = [{pipeline_mode = #tpu.pipeline_mode<synchronous>, transform_indices = @transform_0, window_bounds = array<i64: 50, 1, 96>}, {pipeline_mode = #tpu.pipeline_mode<synchronous>, transform_indices = @transform_1, window_bounds = array<i64: 1, 32>}, {pipeline_mode = #tpu.pipeline_mode<synchronous>, transform_indices = @transform_2, window_bounds = array<i64: 32, 96>}, {pipeline_mode = #tpu.pipeline_mode<synchronous>, transform_indices = @transform_3, window_bounds = array<i64: 32, 96>}, {pipeline_mode = #tpu.pipeline_mode<synchronous>, transform_indices = @transform_4, window_bounds = array<i64: 1, 128>}, {pipeline_mode = #tpu.pipeline_mode<synchronous>, transform_indices = @transform_5, window_bounds = array<i64: 1, 1, 32>}]} {
    %c0 = arith.constant 0 : index
    %c0_0 = arith.constant 0 : index
    %0 = vector.load %arg5[%c0, %c0_0] : memref<32x96xf32, #tpu.memory_space<vmem>>, vector<32x96xf32>
    %c0_1 = arith.constant 0 : index
    %c0_2 = arith.constant 0 : index
    %1 = vector.load %arg6[%c0_1, %c0_2] : memref<1x128xf32, #tpu.memory_space<vmem>>, vector<1x128xf32>
    %2 = vector.extract_strided_slice %1 {offsets = [0, 96], sizes = [1, 32], strides = [1, 1]} : vector<1x128xf32> to vector<1x32xf32>
    %c0_3 = arith.constant 0 : index
    %c0_4 = arith.constant 0 : index
    %3 = vector.load %arg3[%c0_3, %c0_4] : memref<1x32xf32, #tpu.memory_space<vmem>>, vector<1x32xf32>
    %c0_i32 = arith.constant 0 : i32
    %4 = arith.index_cast %c0_i32 : i32 to index
    %5 = memref.load %arg1[%4] : memref<1xi32, #tpu.memory_space<smem>>
    %6 = arith.index_cast %5 : i32 to index
    %c0_5 = arith.constant 0 : index
    %c0_6 = arith.constant 0 : index
    %7 = vector.load %arg2[%6, %c0_5, %c0_6] : memref<50x1x96xf32, #tpu.memory_space<vmem>>, vector<1x1x96xf32>
    %8 = vector.shape_cast %7 : vector<1x1x96xf32> to vector<1x96xf32>
    %cst = arith.constant dense<0.000000e+00> : vector<1x96xf32>
    %9 = tpu.matmul %3, %0, %cst {dimension_numbers = #tpu.dot_dimension_numbers<[1], [0], [0], [1], [0, 0, 1, 1], [], []>} : vector<1x32xf32>, vector<32x96xf32>, vector<1x96xf32> -> vector<1x96xf32>
    %10 = vector.extract_strided_slice %8 {offsets = [0, 0], sizes = [1, 64], strides = [1, 1]} : vector<1x96xf32> to vector<1x64xf32>
    %11 = vector.extract_strided_slice %9 {offsets = [0, 0], sizes = [1, 64], strides = [1, 1]} : vector<1x96xf32> to vector<1x64xf32>
    %12 = arith.addf %10, %11 : vector<1x64xf32>
    %13 = arith.negf %12 : vector<1x64xf32>
    %14 = math.exp %13 : vector<1x64xf32>
    %cst_7 = arith.constant 1.000000e+00 : f32
    %15 = vector.broadcast %cst_7 : f32 to vector<1x64xf32>
    %16 = arith.addf %15, %14 : vector<1x64xf32>
    %17 = arith.divf %15, %16 : vector<1x64xf32>
    %18 = vector.extract_strided_slice %17 {offsets = [0, 0], sizes = [1, 32], strides = [1, 1]} : vector<1x64xf32> to vector<1x32xf32>
    %19 = vector.extract_strided_slice %17 {offsets = [0, 32], sizes = [1, 32], strides = [1, 1]} : vector<1x64xf32> to vector<1x32xf32>
    %20 = vector.extract_strided_slice %8 {offsets = [0, 64], sizes = [1, 32], strides = [1, 1]} : vector<1x96xf32> to vector<1x32xf32>
    %21 = vector.extract_strided_slice %9 {offsets = [0, 64], sizes = [1, 32], strides = [1, 1]} : vector<1x96xf32> to vector<1x32xf32>
    %22 = arith.addf %21, %2 : vector<1x32xf32>
    %23 = arith.mulf %18, %22 : vector<1x32xf32>
    %24 = arith.addf %20, %23 : vector<1x32xf32>
    %25 = math.tanh %24 : vector<1x32xf32>
    %cst_8 = arith.constant 1.000000e+00 : f32
    %26 = vector.broadcast %cst_8 : f32 to vector<1x32xf32>
    %27 = arith.subf %26, %19 : vector<1x32xf32>
    %28 = arith.mulf %27, %25 : vector<1x32xf32>
    %29 = arith.mulf %19, %3 : vector<1x32xf32>
    %30 = arith.addf %28, %29 : vector<1x32xf32>
    %31 = arith.index_cast %c0_i32 : i32 to index
    %c0_9 = arith.constant 0 : index
    %c0_10 = arith.constant 0 : index
    %32 = vector.load %arg7[%31, %c0_9, %c0_10] : memref<1x1x32xf32, #tpu.memory_space<vmem>>, vector<1x1x32xf32>
    %33 = vector.shape_cast %32 : vector<1x1x32xf32> to vector<1x32xf32>
    %34 = vector.shape_cast %30 : vector<1x32xf32> to vector<1x1x32xf32>
    tpu.vector_store %arg7[%31, %c0_9, %c0_10], %34 {strides = array<i32>} : memref<1x1x32xf32, #tpu.memory_space<vmem>>, vector<1x1x32xf32>,
    %c1_i32 = arith.constant 1 : i32
    return
  }
  func.func @transform_0(%arg0: i32, %arg1: memref<1xi32, #tpu.memory_space<smem>>) -> (i32, i32, i32) {
    %c0_i32 = arith.constant 0 : i32
    %c0_i32_0 = arith.constant 0 : i32
    %c0_i32_1 = arith.constant 0 : i32
    %c0_i32_2 = arith.constant 0 : i32
    return %c0_i32, %c0_i32_0, %c0_i32_1 : i32, i32, i32
  }
  func.func @transform_1(%arg0: i32, %arg1: memref<1xi32, #tpu.memory_space<smem>>) -> (i32, i32) {
    %c0_i32 = arith.constant 0 : i32
    %c0_i32_0 = arith.constant 0 : i32
    %c0_i32_1 = arith.constant 0 : i32
    return %c0_i32, %c0_i32_0 : i32, i32
  }
  func.func @transform_2(%arg0: i32, %arg1: memref<1xi32, #tpu.memory_space<smem>>) -> (i32, i32) {
    %c0_i32 = arith.constant 0 : i32
    %c0_i32_0 = arith.constant 0 : i32
    %c0_i32_1 = arith.constant 0 : i32
    return %c0_i32, %c0_i32_0 : i32, i32
  }
  func.func @transform_3(%arg0: i32, %arg1: memref<1xi32, #tpu.memory_space<smem>>) -> (i32, i32) {
    %c0_i32 = arith.constant 0 : i32
    %c0_i32_0 = arith.constant 0 : i32
    %c0_i32_1 = arith.constant 0 : i32
    return %c0_i32, %c0_i32_0 : i32, i32
  }
  func.func @transform_4(%arg0: i32, %arg1: memref<1xi32, #tpu.memory_space<smem>>) -> (i32, i32) {
    %c0_i32 = arith.constant 0 : i32
    %c0_i32_0 = arith.constant 0 : i32
    %c0_i32_1 = arith.constant 0 : i32
    return %c0_i32, %c0_i32_0 : i32, i32
  }
  func.func @transform_5(%arg0: i32, %arg1: memref<1xi32, #tpu.memory_space<smem>>) -> (i32, i32, i32) {
    %c0_i32 = arith.constant 0 : i32
    %c0_i32_0 = arith.constant 0 : i32
    %c0_i32_1 = arith.constant 0 : i32
    %c0_i32_2 = arith.constant 0 : i32
    return %c0_i32, %c0_i32_0, %c0_i32_1 : i32, i32, i32
  }
}

</mosaic_0001>

<llo_original>
// kernel: tpu_custom_call.1
$region0: #{tpu_custom_call.1}
  #allocation0 [shape = 'u32[]', space=smem, size = 0x4, offset = 0x4, fixed_abs, tag = 'smem constant byte address 0x4 - core index']
  #allocation1 [shape = 'u32[144,128]{1,0:T(1,128)}', space=vmem, size = 0x12000, scoped, tag = 'internal scratch']
  #allocation2 [shape = 's32[1]{0}', space=sflag, size = 0x4, scoped, tag = 'scoped memory for tpu_custom_call.1']
  #allocation3 [shape = 's32[1]{0:T(128)S(6)}', space=smem, size = 0x200, scoped, tag = 'prefetched SMEM operand 0']
  %s0 = inlined_call_operand.<no memory space> [shape: s32[1], index: 0, kind: input, shape index: {}]
  %s1 = inlined_call_operand.hbm [shape: f32[50,1,96], index: 1, kind: input, shape index: {}]
  %s2 = inlined_call_operand.vmem [shape: f32[1,32], index: 2, kind: input, shape index: {}]
  %s3 = inlined_call_operand.hbm [shape: f32[32,96], index: 3, kind: input, shape index: {}]
  %s4 = inlined_call_operand.hbm [shape: f32[32,96], index: 4, kind: input, shape index: {}]
  %s5 = inlined_call_operand.vmem [shape: f32[1,128], index: 5, kind: input, shape index: {}]
  %s6 = inlined_call_operand.hbm [shape: f32[1,1,32], index: 6, kind: output, shape index: {}]
  %s7 = sld [smem:[#allocation0]]
  $region42: #{tpu_custom_call.1} parent=0
    _
  %s9 = ssub.s32 1, %s7
  %s10 = scalar_select 0, %s9, %s7
  %11 = sst [smem:[#allocation3]] %s0
  $region1: #{tpu_custom_call.1} parent=0
    #allocation4 [shape = 'u8[25600]{0}', space=vmem, size = 0x6400, scoped, tag = 'input window, operand 1, single buffered']
    #allocation5 [shape = 's32[1]{0}', space=sflag, size = 0x4, scoped, tag = 'scoped memory for tpu_custom_call.1']
    #allocation6 [shape = 's32[1]{0}', space=sflag, size = 0x4, scoped, tag = 'scoped memory for tpu_custom_call.1']
    #allocation7 [shape = 'u8[16384]{0}', space=vmem, size = 0x4000, scoped, tag = 'input window, operand 3, single buffered']
    #allocation8 [shape = 's32[1]{0}', space=sflag, size = 0x4, scoped, tag = 'scoped memory for tpu_custom_call.1']
    #allocation9 [shape = 'u8[16384]{0}', space=vmem, size = 0x4000, scoped, tag = 'input window, operand 4, single buffered']
    #allocation10 [shape = 'u8[512]{0}', space=vmem, size = 0x400, scoped, tag = 'output window, operand 0, single buffered']
    %12 = vsyncpa [#allocation5], 0
    %13 = vsyncpa [#allocation8], 0
    %14 = vsyncpa [#allocation6], 0
    // Predicated region
    $region2: #{tpu_custom_call.1} parent=1 // pred_check
      _
    $region3: #{tpu_custom_call.1} parent=1 // pred_check_branch
      %16 = sbr.rel (0) target = $region5
    $region4: #{tpu_custom_call.1} parent=1 // pred_region
      %s18 = ssub.s32 800, 800
      %19 = vsyncadd [#allocation5], %s18
      %s20 = sshll.u32 [#allocation4], 4
      %s21 = int_to_ptr.vmem [resolvable:$true] %s20
      %26 = dma.hbm_to_vmem [thread:$0]  %s1, 800, %s21, [#allocation5], 16, 16, 1
    $region5: #{tpu_custom_call.1} parent=1 // pred_fallthru
      _
    // Predicated region
    $region6: #{tpu_custom_call.1} parent=1 // pred_check
      _
    $region7: #{tpu_custom_call.1} parent=1 // pred_check_branch
      %28 = sbr.rel (0) target = $region9
    $region8: #{tpu_custom_call.1} parent=1 // pred_region
      _
    $region9: #{tpu_custom_call.1} parent=1 // pred_fallthru
      _
    // Predicated region
    $region10: #{tpu_custom_call.1} parent=1 // pred_check
      _
    $region11: #{tpu_custom_call.1} parent=1 // pred_check_branch
      %30 = sbr.rel (0) target = $region13
    $region12: #{tpu_custom_call.1} parent=1 // pred_region
      %s32 = ssub.s32 512, 512
      %33 = vsyncadd [#allocation8], %s32
      %s34 = sshll.u32 [#allocation7], 4
      %s35 = int_to_ptr.vmem [resolvable:$true] %s34
      %40 = dma.hbm_to_vmem [thread:$0]  %s3, 512, %s35, [#allocation8], 128, 128, 8
    $region13: #{tpu_custom_call.1} parent=1 // pred_fallthru
      _
    // Predicated region
    $region14: #{tpu_custom_call.1} parent=1 // pred_check
      _
    $region15: #{tpu_custom_call.1} parent=1 // pred_check_branch
      %42 = sbr.rel (0) target = $region17
    $region16: #{tpu_custom_call.1} parent=1 // pred_region
      %s44 = ssub.s32 512, 512
      %45 = vsyncadd [#allocation8], %s44
      %s46 = sshll.u32 [#allocation9], 4
      %s47 = int_to_ptr.vmem [resolvable:$true] %s46
      %52 = dma.hbm_to_vmem [thread:$0]  %s4, 512, %s47, [#allocation8], 128, 128, 8
    $region17: #{tpu_custom_call.1} parent=1 // pred_fallthru
      _
    // Predicated region
    $region18: #{tpu_custom_call.1} parent=1 // pred_check
      _
    $region19: #{tpu_custom_call.1} parent=1 // pred_check_branch
      %54 = sbr.rel (0) target = $region21
    $region20: #{tpu_custom_call.1} parent=1 // pred_region
      _
    $region21: #{tpu_custom_call.1} parent=1 // pred_fallthru
      _
    // Predicated region
    $region22: #{tpu_custom_call.1} parent=1 // pred_check
      _
    $region23: #{tpu_custom_call.1} parent=1 // pred_check_branch
      %56 = sbr.rel (0) target = $region25
    $region24: #{tpu_custom_call.1} parent=1 // pred_region
      %57 = dma.done [#allocation5], 800
    $region25: #{tpu_custom_call.1} parent=1 // pred_fallthru
      _
    // Predicated region
    $region26: #{tpu_custom_call.1} parent=1 // pred_check
      _
    $region27: #{tpu_custom_call.1} parent=1 // pred_check_branch
      %59 = sbr.rel (0) target = $region29
    $region28: #{tpu_custom_call.1} parent=1 // pred_region
      %60 = dma.done [#allocation8], 512
    $region29: #{tpu_custom_call.1} parent=1 // pred_fallthru
      _
    // Predicated region
    $region30: #{tpu_custom_call.1} parent=1 // pred_check
      _
    $region31: #{tpu_custom_call.1} parent=1 // pred_check_branch
      %62 = sbr.rel (0) target = $region33
    $region32: #{tpu_custom_call.1} parent=1 // pred_region
      %63 = dma.done [#allocation8], 512
    $region33: #{tpu_custom_call.1} parent=1 // pred_fallthru
      _
    %v64 = vld [vmem:[#allocation9] sm:$0xff]
    %v65 = vld [vmem:[#allocation9 + $0x8] sm:$0xff]
    %v66 = vld [vmem:[#allocation9 + $0x10] sm:$0xff]
    %v67 = vld [vmem:[#allocation9 + $0x18] sm:$0xff]
    %v68 = vld [vmem:[%s5] sm:$0x1]
    %v69 = vld [vmem:[%s2] sm:$0x1]
    %s70 = sld [smem:[#allocation3]]
    %s71 = scalar_lea.vmem [#allocation4], %s70
    %v72 = vld [vmem:[%s71] sm:$0x1]
    %vm73 = vcmask 261120
    %v75 = vsel %vm73, %v69, 0
    %77 = vmatprep.subr.mxu0 0.0
    %78 = vmatpush1.msra.mxu0 0.0
    %79 = vmatprep.subr.mxu0 0.0
    %80 = vmatpush1.msra.mxu0 0.0
    %81 = vmatprep.subr.mxu0 0.0
    %82 = vmatpush1.msra.mxu0 0.0
    %83 = vmatprep.subr.mxu0 0.0
    %84 = vmatpush1.msra.mxu0 0.0
    %85 = vmatprep.subr.mxu0 0.0
    %86 = vmatpush1.msra.mxu0 0.0
    %87 = vmatprep.subr.mxu0 0.0
    %88 = vmatpush1.msra.mxu0 0.0
    %89 = vmatprep.subr.mxu0 0.0
    %90 = vmatpush1.msra.mxu0 0.0
    %91 = vmatprep.subr.mxu0 0.0
    %92 = vmatpush1.msra.mxu0 0.0
    %93 = vmatprep.subr.mxu0 0.0
    %94 = vmatpush1.msra.mxu0 0.0
    %95 = vmatprep.subr.mxu0 0.0
    %96 = vmatpush1.msra.mxu0 0.0
    %97 = vmatprep.subr.mxu0 0.0
    %98 = vmatpush1.msra.mxu0 0.0
    %99 = vmatprep.subr.mxu0 0.0
    %100 = vmatpush1.msra.mxu0 0.0
    %101 = vmatprep.subr.mxu0 0.0
    %102 = vmatpush1.msra.mxu0 %v67
    %103 = vmatprep.subr.mxu0 0.0
    %104 = vmatpush1.msra.mxu0 %v66
    %105 = vmatprep.subr.mxu0 0.0
    %106 = vmatpush1.msra.mxu0 %v65
    %107 = vmatprep.subr.mxu0 0.0
    %108 = vmatpush1.msra.mxu0 %v64
    %109 = vmatprep.subr.mxu0 0.0
    %110 = vmatpush2.msra.mxu0 0.0
    %111 = vmatprep.subr.mxu0 0.0
    %112 = vmatpush2.msra.mxu0 0.0
    %113 = vmatprep.subr.mxu0 0.0
    %114 = vmatpush2.msra.mxu0 0.0
    %115 = vmatprep.subr.mxu0 0.0
    %116 = vmatpush2.msra.mxu0 0.0
    %117 = vmatprep.subr.mxu0 0.0
    %118 = vmatpush2.msra.mxu0 0.0
    %119 = vmatprep.subr.mxu0 0.0
    %120 = vmatpush2.msra.mxu0 0.0
    %121 = vmatprep.subr.mxu0 0.0
    %122 = vmatpush2.msra.mxu0 0.0
    %123 = vmatprep.subr.mxu0 0.0
    %124 = vmatpush2.msra.mxu0 0.0
    %125 = vmatprep.subr.mxu0 0.0
    %126 = vmatpush2.msra.mxu0 0.0
    %127 = vmatprep.subr.mxu0 0.0
    %128 = vmatpush2.msra.mxu0 0.0
    %129 = vmatprep.subr.mxu0 0.0
    %130 = vmatpush2.msra.mxu0 0.0
    %131 = vmatprep.subr.mxu0 0.0
    %132 = vmatpush2.msra.mxu0 0.0
    %133 = vmatprep.subr.mxu0 0.0
    %134 = vmatpush2.msra.mxu0 0.0
    %135 = vmatprep.subr.mxu0 0.0
    %136 = vmatpush2.msra.mxu0 0.0
    %137 = vmatprep.subr.mxu0 0.0
    %138 = vmatpush2.msra.mxu0 0.0
    %139 = vmatprep.subr.mxu0 0.0
    %140 = vmatpush2.msra.mxu0 0.0
    %141 = vmatprep.mubr.f32.mxu0 0.0
    %142 = vmatmul.mubr.f32.gmra.mxu0 %v75
    %v143 = vpop.f32.mrf.mxu0
    %v144 = vadd.f32 0.0, %v143
    %v145 = vpop.f32.mrf.mxu0
    %146 = vdwg.mxu0
    %v147 = vadd.f32 %v72, %v144
    %v148 = vxor.u32 %v147, 2147483648
    %v149 = vmul.f32 %v148, 1.442695
    %v150 = vpow.pop %v149
    %v151 = vadd.f32 %v150, 1.0
    %v152 = vrcp.pop %v151
    %v153 = vmul.f32 1.0, %v152
    %v155 = vlaneseq
    %v156 = vshrl.u32 %v155, 7
    %v157 = vsub.s32 0, %v156
    %v158 = vrot.slane %v68, %v157
    %159 = vrot.lane.b32.xlu0 %v158, 96
    %v160 = vpop.permute.xlu0 %159
    %v162 = vadd.f32 %v144, %v160
    %v165 = vunpack.c.l.s4 1966171168
    %v166 = vunpack.c.0.s8 %v165
    %v167 = vlaneseq
    %v168 = vshrl.u32 %v167, 7
    %v169 = vsub.s32 %v166, %v168
    %v170 = vrot.slane %v162, %v169
    %v172 = vunpack.c.l.s4 1966171168
    %v173 = vunpack.c.0.s8 %v172
    %v174 = vlaneseq
    %v175 = vshrl.u32 %v174, 7
    %v176 = vsub.s32 %v173, %v175
    %v177 = vrot.slane %v170, %v176
    %178 = vrot.lane.b32.xlu0 %v177, 64
    %v179 = vpop.permute.xlu0 %178
    %v181 = vmul.f32 %v153, %v179
    %183 = vrot.lane.b32.xlu0 %v181, 64
    %v184 = vpop.permute.xlu0 %183
    %v186 = vadd.f32 %v72, %v184
    %v187 = vtanh.pop %v186
    %v188 = vsub.f32 1.0, %v153
    %190 = vrot.lane.b32.xlu0 %v187, 96
    %v191 = vpop.permute.xlu0 %190
    %v193 = vmul.f32 %v188, %v191
    %194 = vrot.lane.b32.xlu0 %v69, 32
    %v195 = vpop.permute.xlu0 %194
    %v197 = vmul.f32 %v153, %v195
    %v198 = vadd.f32 %v193, %v197
    %v200 = vlaneseq
    %v201 = vshrl.u32 %v200, 7
    %v202 = vsub.s32 0, %v201
    %v203 = vrot.slane %v198, %v202
    %204 = vrot.lane.b32.xlu0 %v203, 96
    %v205 = vpop.permute.xlu0 %204
    %vm207 = vcmask 253952
    %208 = vst.msk [vmem:[#allocation10] sm:$0x1] %vm207, %v205
    // Predicated region
    $region34: #{tpu_custom_call.1} parent=1 // pred_check
      _
    $region35: #{tpu_custom_call.1} parent=1 // pred_check_branch
      %210 = sbr.rel (0) target = $region37
    $region36: #{tpu_custom_call.1} parent=1 // pred_region
      %s212 = ssub.s32 16, 16
      %213 = vsyncadd [#allocation6], %s212
      %s215 = sshll.u32 [#allocation10], 4
      %s216 = int_to_ptr.vmem [resolvable:$true] %s215
      %218 = dma.vmem_to_hbm [thread:$0]  %s216, 16, %s6, [#allocation6]
    $region37: #{tpu_custom_call.1} parent=1 // pred_fallthru
      _
    // Predicated region
    $region38: #{tpu_custom_call.1} parent=1 // pred_check
      _
    $region39: #{tpu_custom_call.1} parent=1 // pred_check_branch
      %220 = sbr.rel (0) target = $region41
    $region40: #{tpu_custom_call.1} parent=1 // pred_region
      %221 = dma.done [#allocation6], 16
    $region41: #{tpu_custom_call.1} parent=1 // pred_fallthru
      _
    %222 = vsyncpa [#allocation5], 1
    %223 = vsyncpa [#allocation8], 1
    %224 = vsyncpa [#allocation6], 1

</llo_original>
